<compile_context>
chip_gen: v5e
topology: v5e:2x2
jax: 0.10.0
libtpu: 0.0.40
codegen_flags: <defaults>
</compile_context>

<pallas_src>
import functools

import jax
import jax.numpy as jnp
from jax import lax
from jax.experimental import pallas as pl
from jax.experimental.pallas import tpu as pltpu

LANE = 128        # TPU lane width: keep feature / hidden / class dims lane-dense
NEG_BIG = -1e30   # masked-edge additive bias; exp underflows to exactly 0 in f32


def _round_up(x, m):
    return ((x + m - 1) // m) * m


def _pad2d(a, rows, cols):
    return jnp.pad(a, ((0, rows - a.shape[0]), (0, cols - a.shape[1])))


def _pick_tile(n):
    # 256 row/col tiles better fill the 256-deep MXU on v6e/v7x.
    return 256 if n >= 256 else 128


# --------------------------- linear (+ReLU) kernel ----------------------------

def _linear_kernel(x_ref, w_ref, b_ref, o_ref, *, relu):
    y = lax.dot_general(x_ref[...].astype(jnp.bfloat16),
                        w_ref[...].astype(jnp.bfloat16),
                        (((1,), (0,)), ((), ())),
                        preferred_element_type=jnp.float32)
    y = y + b_ref[...]
    if relu:
        y = jnp.maximum(y, 0.0)
    o_ref[...] = y


def _linear(x, w, b, *, relu, tile):
    n_pad = x.shape[0]
    k_pad, m_pad = w.shape
    return pl.pallas_call(
        functools.partial(_linear_kernel, relu=relu),
        out_shape=jax.ShapeDtypeStruct((n_pad, m_pad), jnp.float32),
        grid=(n_pad // tile,),
        in_specs=[
            pl.BlockSpec((tile, k_pad), lambda i: (i, 0)),
            pl.BlockSpec((k_pad, m_pad), lambda i: (0, 0)),
            pl.BlockSpec((1, m_pad), lambda i: (0, 0)),
        ],
        out_specs=pl.BlockSpec((tile, m_pad), lambda i: (i, 0)),
        compiler_params=pltpu.CompilerParams(
            dimension_semantics=("parallel",)),
    )(x, w, b)


# --------------------- AGNNConv: tiled online-softmax kernel ------------------

def _agnn_conv_kernel(occ_ref, beta_ref, hq_ref, hk_ref, adj_ref, o_ref,
                      qn_sc, m_sc, l_sc, acc_sc):
    k = pl.program_id(1)
    n_col = pl.num_programs(1)

    # New destination-row tile: normalize query rows once, reset running stats.
    @pl.when(k == 0)
    def _init():
        hq = hq_ref[...]
        ssq = jnp.sum(hq * hq, axis=-1, keepdims=True)
        qn_sc[...] = (hq * lax.rsqrt(jnp.maximum(ssq, 1e-24))).astype(jnp.bfloat16)
        m_sc[...] = jnp.full(m_sc.shape, -jnp.inf, m_sc.dtype)
        l_sc[...] = jnp.zeros(l_sc.shape, l_sc.dtype)
        acc_sc[...] = jnp.zeros(acc_sc.shape, acc_sc.dtype)

    has_edges = occ_ref[pl.program_id(0) * n_col + k] > 0

    # Fully-masked (row_tile, col_tile) blocks contribute nothing: skip them.
    @pl.when(has_edges)
    def _tile():
        beta = beta_ref[0]                               # SMEM scalar
        hk = hk_ref[...]                                 # (T, H) f32 source rows
        ssq = jnp.sum(hk * hk, axis=-1, keepdims=True)
        kn = (hk * lax.rsqrt(jnp.maximum(ssq, 1e-24))).astype(jnp.bfloat16)
        # cosine similarity q @ k^T (bf16 MXU, f32 accumulation)
        cos = lax.dot_general(qn_sc[...], kn, (((1,), (1,)), ((), ())),
                              preferred_element_type=jnp.float32)
        adjf = adj_ref[...].astype(jnp.float32)          # int8 0/1 -> f32
        e = jnp.where(adjf != 0, cos * beta, NEG_BIG)
        # online softmax update (running max / denominator / accumulator)
        m_new = jnp.maximum(m_sc[...], jnp.max(e, axis=-1, keepdims=True))
        alpha = jnp.exp(m_sc[...] - m_new)
        p = jnp.exp(e - m_new)                           # masked entries -> 0
        l_sc[...] = alpha * l_sc[...] + jnp.sum(p, axis=-1, keepdims=True)
        acc_sc[...] = alpha * acc_sc[...] + lax.dot_general(
            p.astype(jnp.bfloat16), hk.astype(jnp.bfloat16),
            (((1,), (0,)), ((), ())), preferred_element_type=jnp.float32)
        m_sc[...] = m_new

    @pl.when(k == n_col - 1)
    def _finish():
        # l >= 1 for every real row (self-loop); the max() only guards padded /
        # fully-skipped rows so they come out as finite zeros, not NaN.
        inv = pl.reciprocal(jnp.maximum(l_sc[...], 1e-20), approx=True)
        o_ref[...] = acc_sc[...] * inv


def _agnn_conv(h, adj_i8, occ, beta, *, tile):
    n_pad, h_pad = h.shape
    r = n_pad // tile
    return pl.pallas_call(
        _agnn_conv_kernel,
        out_shape=jax.ShapeDtypeStruct((n_pad, h_pad), jnp.float32),
        grid_spec=pltpu.PrefetchScalarGridSpec(
            num_scalar_prefetch=1,                       # block-occupancy table
            grid=(r, r),
            in_specs=[
                pl.BlockSpec(memory_space=pltpu.MemorySpace.SMEM),        # beta
                pl.BlockSpec((tile, h_pad), lambda i, k, _occ: (i, 0)),   # h (dst rows)
                pl.BlockSpec((tile, h_pad), lambda i, k, _occ: (k, 0)),   # h (src rows)
                pl.BlockSpec((tile, tile), lambda i, k, _occ: (i, k)),    # adj int8 tile
            ],
            out_specs=pl.BlockSpec((tile, h_pad), lambda i, k, _occ: (i, 0)),
            scratch_shapes=[
                pltpu.VMEM((tile, h_pad), jnp.bfloat16),  # normalized query rows
                pltpu.VMEM((tile, 1), jnp.float32),       # running max
                pltpu.VMEM((tile, 1), jnp.float32),       # running denominator
                pltpu.VMEM((tile, h_pad), jnp.float32),   # output accumulator
            ]),
        compiler_params=pltpu.CompilerParams(
            dimension_semantics=("parallel", "arbitrary"),
            vmem_limit_bytes=48 * 1024 * 1024),
    )(occ, beta, h, h, adj_i8)


# ----------------------------- full forward -----------------------------------

def agnn_forward(features, adj, params):
    """Full AGNN forward (eval mode): proj -> n_layers x AGNNConv -> cls."""
    n, in_feats = features.shape
    n_hidden = params["w_proj"].shape[1]
    n_classes = params["w_cls"].shape[1]
    n_layers = int(params["betas"].shape[0])

    tile = _pick_tile(n)
    n_pad = _round_up(n, tile)
    f_pad = _round_up(max(in_feats, LANE), LANE)
    h_pad = _round_up(max(n_hidden, LANE), LANE)
    c_pad = _round_up(max(n_classes, LANE), LANE)

    # Zero-padding is exact: padded hidden/class columns stay zero through
    # ReLU / norm / conv; padded source rows are masked out by the adjacency;
    # padded destination rows are sliced off below.
    x = _pad2d(features, n_pad, f_pad)
    w_proj = _pad2d(params["w_proj"], f_pad, h_pad)
    b_proj = _pad2d(params["b_proj"], 1, h_pad)
    w_cls = _pad2d(params["w_cls"], h_pad, c_pad)
    b_cls = _pad2d(params["b_cls"], 1, c_pad)

    # Compact int8 adjacency (4x less DMA than an f32 additive mask).
    adj_i8 = _pad2d((adj > 0).astype(jnp.int8), n_pad, n_pad)

    # Per-(row_tile, col_tile) occupancy, computed once and reused by all layers.
    r = n_pad // tile
    occ = (adj_i8.astype(jnp.int32).reshape(r, tile, r, tile).sum(axis=(1, 3)) > 0)
    occ = occ.astype(jnp.int32).reshape(-1)

    h = _linear(x, w_proj, b_proj, relu=True, tile=tile)
    for layer in range(n_layers):
        beta = params["betas"][layer].reshape(1)
        h = _agnn_conv(h, adj_i8, occ, beta, tile=tile)
    y = _linear(h, w_cls, b_cls, relu=False, tile=tile)
    return y[:n, :n_classes]


# ----------------------------- reference (pure JAX, f32) -----------------------

def _reference_forward(features, adj, params):
    h = jnp.maximum(features @ params["w_proj"] + params["b_proj"], 0.0)
    for layer in range(params["betas"].shape[0]):
        beta = params["betas"][layer]
        norm = jnp.linalg.norm(h, axis=-1, keepdims=True)
        hn = h / jnp.maximum(norm, 1e-12)
        cos = hn @ hn.T
        e = jnp.where(adj > 0, cos * beta, -jnp.inf)
        p = jax.nn.softmax(e, axis=-1)
        h = p @ h
    return h @ params["w_cls"] + params["b_cls"]


# ----------------------------- setup / main ------------------------------------

def make_params(key, in_feats, n_hidden, n_classes, n_layers, init_beta):
    k1, k2, k3, k4 = jax.random.split(key, 4)
    s1 = 1.0 / float(jnp.sqrt(in_feats))
    s2 = 1.0 / float(jnp.sqrt(n_hidden))
    return {
        "w_proj": jax.random.uniform(k1, (in_feats, n_hidden), jnp.float32, -s1, s1),
        "b_proj": jax.random.uniform(k2, (1, n_hidden), jnp.float32, -s1, s1),
        "w_cls": jax.random.uniform(k3, (n_hidden, n_classes), jnp.float32, -s2, s2),
        "b_cls": jax.random.uniform(k4, (1, n_classes), jnp.float32, -s2, s2),
        "betas": jnp.full((n_layers,), init_beta, jnp.float32),   # one beta per layer
    }


def make_graph(key, n_nodes, p_edge=0.05):
    # deterministic random directed graph + self-loops, dense 0/1 mask
    a = (jax.random.uniform(key, (n_nodes, n_nodes)) < p_edge).astype(jnp.float32)
    return jnp.maximum(a, jnp.eye(n_nodes, dtype=jnp.float32))


if __name__ == "__main__":
    N_NODES = 384      # padded to 512 internally -> 2x2 tile grid of 256
    IN_FEATS = 64
    N_HIDDEN = 32
    N_CLASSES = 8
    N_LAYERS = 2
    INIT_BETA = 1.0

    key = jax.random.PRNGKey(0)
    k_feat, k_graph, k_param = jax.random.split(key, 3)

    features = jax.random.normal(k_feat, (N_NODES, IN_FEATS), jnp.float32)
    adj = make_graph(k_graph, N_NODES)
    params = make_params(k_param, IN_FEATS, N_HIDDEN, N_CLASSES, N_LAYERS, INIT_BETA)

    logits = agnn_forward(features, adj, params)
    jax.block_until_ready(logits)

    ref = _reference_forward(features, adj, params)
    max_err = float(jnp.max(jnp.abs(logits - ref)))

    assert logits.shape == (N_NODES, N_CLASSES)
    assert bool(jnp.all(jnp.isfinite(logits)))
    assert max_err < 1e-1, f"max abs err vs f32 reference: {max_err}"
    print("KERNEL_OK")
</pallas_src>

<mosaic_0001>
module attributes {stable_mosaic.version = 11 : i64} {
  func.func @_linear_kernel(%arg0: i32, %arg1: memref<256x128xf32, #tpu.memory_space<vmem>>, %arg2: memref<128x128xf32, #tpu.memory_space<vmem>>, %arg3: memref<1x128xf32, #tpu.memory_space<vmem>>, %arg4: memref<256x128xf32, #tpu.memory_space<vmem>>) attributes {dimension_semantics = [#tpu.dimension_semantics<parallel>], iteration_bounds = array<i64: 2>, scalar_prefetch = 0 : i64, scratch_operands = 0 : i64, tpu.core_type = #tpu.core_type<tc>, window_params = [{transform_indices = @transform_0, window_bounds = array<i64: 256, 128>}, {pipeline_mode = #tpu.pipeline_mode<synchronous>, transform_indices = @transform_1, window_bounds = array<i64: 128, 128>}, {pipeline_mode = #tpu.pipeline_mode<synchronous>, transform_indices = @transform_2, window_bounds = array<i64: 1, 128>}, {transform_indices = @transform_3, window_bounds = array<i64: 256, 128>}]} {
    %c0 = arith.constant 0 : index
    %c0_0 = arith.constant 0 : index
    %0 = vector.load %arg1[%c0, %c0_0] : memref<256x128xf32, #tpu.memory_space<vmem>>, vector<256x128xf32>
    %1 = arith.truncf %0 : vector<256x128xf32> to vector<256x128xbf16>
    %c0_1 = arith.constant 0 : index
    %c0_2 = arith.constant 0 : index
    %2 = vector.load %arg2[%c0_1, %c0_2] : memref<128x128xf32, #tpu.memory_space<vmem>>, vector<128x128xf32>
    %3 = arith.truncf %2 : vector<128x128xf32> to vector<128x128xbf16>
    %cst = arith.constant dense<0.000000e+00> : vector<256x128xf32>
    %4 = tpu.matmul %1, %3, %cst {dimension_numbers = #tpu.dot_dimension_numbers<[1], [0], [0], [1], [0, 0, 1, 1], [], []>} : vector<256x128xbf16>, vector<128x128xbf16>, vector<256x128xf32> -> vector<256x128xf32>
    %c0_3 = arith.constant 0 : index
    %c0_4 = arith.constant 0 : index
    %5 = vector.load %arg3[%c0_3, %c0_4] : memref<1x128xf32, #tpu.memory_space<vmem>>, vector<1x128xf32>
    %6 = vector.broadcast %5 : vector<1x128xf32> to vector<256x128xf32>
    %7 = arith.addf %4, %6 : vector<256x128xf32>
    %cst_5 = arith.constant 0.000000e+00 : f32
    %8 = vector.broadcast %cst_5 : f32 to vector<256x128xf32>
    %9 = arith.maximumf %7, %8 : vector<256x128xf32>
    %c0_6 = arith.constant 0 : index
    %c0_7 = arith.constant 0 : index
    %10 = vector.load %arg4[%c0_6, %c0_7] : memref<256x128xf32, #tpu.memory_space<vmem>>, vector<256x128xf32>
    tpu.vector_store %arg4[%c0_6, %c0_7], %9 {strides = array<i32>} : memref<256x128xf32, #tpu.memory_space<vmem>>, vector<256x128xf32>,
    return
  }
  func.func @transform_0(%arg0: i32) -> (i32, i32) {
    %c0_i32 = arith.constant 0 : i32
    %c0_i32_0 = arith.constant 0 : i32
    return %arg0, %c0_i32 : i32, i32
  }
  func.func @transform_1(%arg0: i32) -> (i32, i32) {
    %c0_i32 = arith.constant 0 : i32
    %c0_i32_0 = arith.constant 0 : i32
    %c0_i32_1 = arith.constant 0 : i32
    return %c0_i32, %c0_i32_0 : i32, i32
  }
  func.func @transform_2(%arg0: i32) -> (i32, i32) {
    %c0_i32 = arith.constant 0 : i32
    %c0_i32_0 = arith.constant 0 : i32
    %c0_i32_1 = arith.constant 0 : i32
    return %c0_i32, %c0_i32_0 : i32, i32
  }
  func.func @transform_3(%arg0: i32) -> (i32, i32) {
    %c0_i32 = arith.constant 0 : i32
    %c0_i32_0 = arith.constant 0 : i32
    return %arg0, %c0_i32 : i32, i32
  }
}

</mosaic_0001>

<llo_original>
// kernel: tpu_custom_call.1
$region0: #{tpu_custom_call.1}
  #allocation0 [shape = 'u32[]', space=smem, size = 0x4, offset = 0x4, fixed_abs, tag = 'smem constant byte address 0x4 - core index']
  #allocation1 [shape = 'u32[72,128]{1,0:T(1,128)}', space=vmem, size = 0x9000, scoped, tag = 'internal scratch']
  %s0 = inlined_call_operand.hbm [shape: f32[512,128], index: 0, kind: input, shape index: {}]
  %s1 = inlined_call_operand.hbm [shape: f32[128,128], index: 1, kind: input, shape index: {}]
  %s2 = inlined_call_operand.vmem [shape: f32[1,128], index: 2, kind: input, shape index: {}]
  %s3 = inlined_call_operand.hbm [shape: f32[512,128], index: 3, kind: output, shape index: {}]
  %s4 = sld [smem:[#allocation0]]
  $region53: #{tpu_custom_call.1} parent=0
    _
  %s6 = ssub.s32 1, %s4
  %s7 = scalar_select 0, %s6, %s4
  $region1: #{tpu_custom_call.1} parent=0
    #allocation2 [shape = 'u8[262144]{0}', space=vmem, size = 0x40000, scoped, tag = 'input window, operand 0']
    #allocation3 [shape = 's32[2]{0}', space=sflag, size = 0x8, scoped, tag = 'scoped memory for tpu_custom_call.1']
    #allocation4 [shape = 's32[2]{0}', space=sflag, size = 0x8, scoped, tag = 'scoped memory for tpu_custom_call.1']
    #allocation5 [shape = 'u8[65536]{0}', space=vmem, size = 0x10000, scoped, tag = 'input window, operand 1, single buffered']
    #allocation6 [shape = 's32[1]{0}', space=sflag, size = 0x4, scoped, tag = 'scoped memory for tpu_custom_call.1']
    #allocation7 [shape = 'u8[262144]{0}', space=vmem, size = 0x40000, scoped, tag = 'output window, operand 0']
    %8 = vsyncpa [#allocation3], 0
    %s9 = scalar_lea.sflag [#allocation3], 1
    %10 = vsyncpa %s9, 0
    %11 = vsyncpa [#allocation6], 0
    %12 = vsyncpa [#allocation4], 0
    %s13 = scalar_lea.sflag [#allocation4], 1
    %14 = vsyncpa %s13, 0
    loop: start=0, step=1, limit=4
    $region2: #{tpu_custom_call.1} parent=1 // loop_pre_header
      _
    $region3: #{tpu_custom_call.1} parent=1 // loop_header
      %s16 = sphi 0, %s20
      %p17 = scmp.ge.s32.totalorder %s16, 4
      %s26 = sphi 0, %s28
      %s29 = sphi 0, %s26
      %s30 = sphi 0, %s29
      %s46 = sphi 0, %s30
      %s50 = sphi 0, %s50
      %s52 = sphi 0, %s50
      %s53 = sphi 0, %s52
      %s67 = sphi 0, %s53
      %s71 = sphi 0, %s71
      %s73 = sphi 0, %s71
      %s74 = sphi 0, %s73
      %s88 = sphi 0, %s74
      %s94 = sphi 0, %s96
      %s97 = sphi 0, %s94
      %s98 = sphi 0, %s97
      %s114 = sphi 0, %s98
    $region4: #{tpu_custom_call.1} parent=1 // loop_header_branch
      %19 = sbr.rel (%p17) target = $region8
    $region5: #{tpu_custom_call.1} parent=1 // loop_body
      %s21 = ssub.s32 %s16, 1
      %s22 = ssub.s32 %s16, 2
      %s23 = sadd.s32 %s16, 1
      %s24 = ssub.s32 %s16, %s23
      %p25 = scmp.eq.s32.totalorder %s24, 0
      %s27 = sadd.s32 %s26, 1
      %s28 = scalar_select %p25, %s26, %s27
      %p31 = pneg %p25
      %p32 = scmp.eq.s32.totalorder %s16, 1
      %p33 = por %p31, %p32
      %p34 = scmp.ne.s32.totalorder %s26, %s29
      %p35 = scmp.eq.s32.totalorder %s16, 0
      %p36 = por %p34, %p35
      %p37 = scmp.ne.s32.totalorder %s26, %s29
      %p38 = scmp.eq.s32.totalorder %s21, 1
      %p39 = por %p37, %p38
      %p40 = scmp.ne.s32.totalorder %s29, %s30
      %p41 = scmp.eq.s32.totalorder %s21, 0
      %p42 = por %p40, %p41
      %p43 = scmp.ne.s32.totalorder %s29, %s30
      %p44 = scmp.eq.s32.totalorder %s22, 1
      %p45 = por %p43, %p44
      %p47 = scmp.ne.s32.totalorder %s30, %s46
      %p48 = scmp.eq.s32.totalorder %s22, 0
      %p49 = por %p47, %p48
      %s51 = sadd.s32 %s50, 1
      %p54 = scmp.eq.s32.totalorder %s16, 1
      %p55 = scmp.ne.s32.totalorder %s50, %s52
      %p56 = scmp.eq.s32.totalorder %s16, 0
      %p57 = por %p55, %p56
      %p58 = scmp.ne.s32.totalorder %s50, %s52
      %p59 = scmp.eq.s32.totalorder %s21, 1
      %p60 = por %p58, %p59
      %p61 = scmp.ne.s32.totalorder %s52, %s53
      %p62 = scmp.eq.s32.totalorder %s21, 0
      %p63 = por %p61, %p62
      %p64 = scmp.ne.s32.totalorder %s52, %s53
      %p65 = scmp.eq.s32.totalorder %s22, 1
      %p66 = por %p64, %p65
      %p68 = scmp.ne.s32.totalorder %s53, %s67
      %p69 = scmp.eq.s32.totalorder %s22, 0
      %p70 = por %p68, %p69
      %s72 = sadd.s32 %s71, 1
      %p75 = scmp.eq.s32.totalorder %s16, 1
      %p76 = scmp.ne.s32.totalorder %s71, %s73
      %p77 = scmp.eq.s32.totalorder %s16, 0
      %p78 = por %p76, %p77
      %p79 = scmp.ne.s32.totalorder %s71, %s73
      %p80 = scmp.eq.s32.totalorder %s21, 1
      %p81 = por %p79, %p80
      %p82 = scmp.ne.s32.totalorder %s73, %s74
      %p83 = scmp.eq.s32.totalorder %s21, 0
      %p84 = por %p82, %p83
      %p85 = scmp.ne.s32.totalorder %s73, %s74
      %p86 = scmp.eq.s32.totalorder %s22, 1
      %p87 = por %p85, %p86
      %p89 = scmp.ne.s32.totalorder %s74, %s88
      %p90 = scmp.eq.s32.totalorder %s22, 0
      %p91 = por %p89, %p90
      %s92 = ssub.s32 %s16, %s23
      %p93 = scmp.eq.s32.totalorder %s92, 0
      %s95 = sadd.s32 %s94, 1
      %s96 = scalar_select %p93, %s94, %s95
      %p99 = pneg %p93
      %p100 = scmp.eq.s32.totalorder %s16, 1
      %p101 = por %p99, %p100
      %p102 = scmp.ne.s32.totalorder %s94, %s97
      %p103 = scmp.eq.s32.totalorder %s16, 0
      %p104 = por %p102, %p103
      %p105 = scmp.ne.s32.totalorder %s94, %s97
      %p106 = scmp.eq.s32.totalorder %s21, 1
      %p107 = por %p105, %p106
      %p108 = scmp.ne.s32.totalorder %s97, %s98
      %p109 = scmp.eq.s32.totalorder %s21, 0
      %p110 = por %p108, %p109
      %p111 = scmp.ne.s32.totalorder %s97, %s98
      %p112 = scmp.eq.s32.totalorder %s22, 1
      %p113 = por %p111, %p112
      %p115 = scmp.ne.s32.totalorder %s98, %s114
      %p116 = scmp.eq.s32.totalorder %s22, 0
      %p117 = por %p115, %p116
      %p118 = scmp.le.s32.totalorder 1, %s16
      %p119 = scmp.lt.s32.totalorder %s16, 3
      %p120 = pnand %p118, %p119
      %p121 = pneg %p120
      // Predicated region
      $region9: #{tpu_custom_call.1} parent=5 // pred_check
        _
      $region10: #{tpu_custom_call.1} parent=5 // pred_check_branch
        %123 = sbr.rel (%p120) target = $region12
      $region11: #{tpu_custom_call.1} parent=5 // pred_region
        %s124 = ssub.s32 %s16, 1
        // Predicated region
        $region13: #{tpu_custom_call.1} parent=11 // pred_check
          %p125 = pneg %p63
        $region14: #{tpu_custom_call.1} parent=11 // pred_check_branch
          %127 = sbr.rel (%p125) target = $region16
        $region15: #{tpu_custom_call.1} parent=11 // pred_region
          %129 = vsyncadd [#allocation6], 0
          %s130 = sshll.u32 %s1, 4
          %s131 = int_to_ptr.hbm [resolvable:$true] %s130
          %s132 = sshll.u32 [#allocation5], 4
          %s133 = int_to_ptr.vmem [resolvable:$true] %s132
          %138 = dma.hbm_to_vmem [thread:$0]  %s131, 2048, %s133, [#allocation6], 128, 128, 8
        $region16: #{tpu_custom_call.1} parent=11 // pred_fallthru
          _
        // Predicated region
        $region17: #{tpu_custom_call.1} parent=11 // pred_check
          %p139 = pneg %p84
        $region18: #{tpu_custom_call.1} parent=11 // pred_check_branch
          %141 = sbr.rel (%p139) target = $region20
        $region19: #{tpu_custom_call.1} parent=11 // pred_region
          _
        $region20: #{tpu_custom_call.1} parent=11 // pred_fallthru
          _
      $region12: #{tpu_custom_call.1} parent=5 // pred_fallthru
        _
      %p142 = scmp.lt.s32.totalorder %s16, 2
      // Predicated region
      $region21: #{tpu_custom_call.1} parent=5 // pred_check
        %p143 = pneg %p142
      $region22: #{tpu_custom_call.1} parent=5 // pred_check_branch
        %145 = sbr.rel (%p143) target = $region24
      $region23: #{tpu_custom_call.1} parent=5 // pred_region
        // Predicated region
        $region25: #{tpu_custom_call.1} parent=23 // pred_check
          %p146 = pneg %p36
        $region26: #{tpu_custom_call.1} parent=23 // pred_check_branch
          %148 = sbr.rel (%p146) target = $region28
        $region27: #{tpu_custom_call.1} parent=23 // pred_region
          %s149 = sand.u32 %s26, 1
          %s150 = scalar_lea.sflag [#allocation3], %s149
          %s151 = sand.u32 %s26, 1
          %s152 = smul.addr %s151, 256
          %s153 = scalar_lea.vmem [#allocation2], %s152
          %s154 = smul.u32 32, %s16
          %156 = vsyncadd %s150, 0
          %s157 = smul.addr %s154, 8
          %s158 = scalar_lea.hbm %s0, %s157
          %s159 = sshll.u32 %s158, 4
          %s160 = int_to_ptr.hbm [resolvable:$true] %s159
          %s161 = sshll.u32 %s153, 4
          %s162 = int_to_ptr.vmem [resolvable:$true] %s161
          %167 = dma.hbm_to_vmem [thread:$0]  %s160, 4096, %s162, %s150, 128, 128, 8
        $region28: #{tpu_custom_call.1} parent=23 // pred_fallthru
          _
      $region24: #{tpu_custom_call.1} parent=5 // pred_fallthru
        _
      %p168 = scmp.le.s32.totalorder 1, %s16
      %p169 = scmp.lt.s32.totalorder %s16, 3
      %p170 = pnand %p168, %p169
      %p171 = pneg %p170
      // Predicated region
      $region29: #{tpu_custom_call.1} parent=5 // pred_check
        _
      $region30: #{tpu_custom_call.1} parent=5 // pred_check_branch
        %173 = sbr.rel (%p170) target = $region32
      $region31: #{tpu_custom_call.1} parent=5 // pred_region
        %s174 = ssub.s32 %s16, 1
        %s175 = sand.u32 %s29, 1
        %s176 = scalar_lea.sflag [#allocation3], %s175
        %s177 = sand.u32 %s29, 1
        %s178 = smul.addr %s177, 256
        %s179 = scalar_lea.vmem [#allocation2], %s178
        // Predicated region
        $region33: #{tpu_custom_call.1} parent=31 // pred_check
          %p180 = pneg %p42
        $region34: #{tpu_custom_call.1} parent=31 // pred_check_branch
          %182 = sbr.rel (%p180) target = $region36
        $region35: #{tpu_custom_call.1} parent=31 // pred_region
          %184 = dma.done %s176, 4096
        $region36: #{tpu_custom_call.1} parent=31 // pred_fallthru
          _
        // Predicated region
        $region37: #{tpu_custom_call.1} parent=31 // pred_check
          %p185 = pneg %p63
        $region38: #{tpu_custom_call.1} parent=31 // pred_check_branch
          %187 = sbr.rel (%p185) target = $region40
        $region39: #{tpu_custom_call.1} parent=31 // pred_region
          %189 = dma.done [#allocation6], 2048
        $region40: #{tpu_custom_call.1} parent=31 // pred_fallthru
          _
        %s190 = sand.u32 %s29, 1
        %s191 = scalar_lea.sflag [#allocation3], %s190
        %s192 = sand.u32 %s29, 1
        %s193 = smul.addr %s192, 256
        %s194 = scalar_lea.vmem [#allocation2], %s193
        %p195 = pneg %p42
        %p196 = pneg %p39
        %p197 = pneg %p63
        %p198 = pneg %p60
        %p199 = pneg %p84
        %p200 = pneg %p81
        %p201 = pneg %p110
        %p202 = pneg %p107
        %s203 = sand.u32 %s97, 1
        %s204 = scalar_lea.sflag [#allocation4], %s203
        %s205 = sand.u32 %s97, 1
        %s206 = smul.addr %s205, 256
        %s207 = scalar_lea.vmem [#allocation7], %s206
        %s208 = smul.u32 32, %s21
        %s209 = smul.u32 32, %s21
        %v210 = vld [vmem:[%s179] sm:$0xff]
        %v211 = vld [vmem:[%s179 + $0x8] sm:$0xff]
        %v212 = vld [vmem:[%s179 + $0x10] sm:$0xff]
        %v213 = vld [vmem:[%s179 + $0x18] sm:$0xff]
        %v214 = vld [vmem:[%s179 + $0x20] sm:$0xff]
        %v215 = vld [vmem:[%s179 + $0x28] sm:$0xff]
        %v216 = vld [vmem:[%s179 + $0x30] sm:$0xff]
        %v217 = vld [vmem:[%s179 + $0x38] sm:$0xff]
        %v218 = vld [vmem:[%s179 + $0x40] sm:$0xff]
        %v219 = vld [vmem:[%s179 + $0x48] sm:$0xff]
        %v220 = vld [vmem:[%s179 + $0x50] sm:$0xff]
        %v221 = vld [vmem:[%s179 + $0x58] sm:$0xff]
        %v222 = vld [vmem:[%s179 + $0x60] sm:$0xff]
        %v223 = vld [vmem:[%s179 + $0x68] sm:$0xff]
        %v224 = vld [vmem:[%s179 + $0x70] sm:$0xff]
        %v225 = vld [vmem:[%s179 + $0x78] sm:$0xff]
        %v226 = vld [vmem:[%s179 + $0x80] sm:$0xff]
        %v227 = vld [vmem:[%s179 + $0x88] sm:$0xff]
        %v228 = vld [vmem:[%s179 + $0x90] sm:$0xff]
        %v229 = vld [vmem:[%s179 + $0x98] sm:$0xff]
        %v230 = vld [vmem:[%s179 + $0xa0] sm:$0xff]
        %v231 = vld [vmem:[%s179 + $0xa8] sm:$0xff]
        %v232 = vld [vmem:[%s179 + $0xb0] sm:$0xff]
        %v233 = vld [vmem:[%s179 + $0xb8] sm:$0xff]
        %v234 = vld [vmem:[%s179 + $0xc0] sm:$0xff]
        %v235 = vld [vmem:[%s179 + $0xc8] sm:$0xff]
        %v236 = vld [vmem:[%s179 + $0xd0] sm:$0xff]
        %v237 = vld [vmem:[%s179 + $0xd8] sm:$0xff]
        %v238 = vld [vmem:[%s179 + $0xe0] sm:$0xff]
        %v239 = vld [vmem:[%s179 + $0xe8] sm:$0xff]
        %v240 = vld [vmem:[%s179 + $0xf0] sm:$0xff]
        %v241 = vld [vmem:[%s179 + $0xf8] sm:$0xff]
        %v242 = vpack.c.bf16 %v211, %v210
        %v243 = vpack.c.bf16 %v213, %v212
        %v244 = vpack.c.bf16 %v215, %v214
        %v245 = vpack.c.bf16 %v217, %v216
        %v246 = vpack.c.bf16 %v219, %v218
        %v247 = vpack.c.bf16 %v221, %v220
        %v248 = vpack.c.bf16 %v223, %v222
        %v249 = vpack.c.bf16 %v225, %v224
        %v250 = vpack.c.bf16 %v227, %v226
        %v251 = vpack.c.bf16 %v229, %v228
        %v252 = vpack.c.bf16 %v231, %v230
        %v253 = vpack.c.bf16 %v233, %v232
        %v254 = vpack.c.bf16 %v235, %v234
        %v255 = vpack.c.bf16 %v237, %v236
        %v256 = vpack.c.bf16 %v239, %v238
        %v257 = vpack.c.bf16 %v241, %v240
        %v258 = vld [vmem:[#allocation5] sm:$0xff]
        %v259 = vld [vmem:[#allocation5 + $0x8] sm:$0xff]
        %v260 = vld [vmem:[#allocation5 + $0x10] sm:$0xff]
        %v261 = vld [vmem:[#allocation5 + $0x18] sm:$0xff]
        %v262 = vld [vmem:[#allocation5 + $0x20] sm:$0xff]
        %v263 = vld [vmem:[#allocation5 + $0x28] sm:$0xff]
        %v264 = vld [vmem:[#allocation5 + $0x30] sm:$0xff]
        %v265 = vld [vmem:[#allocation5 + $0x38] sm:$0xff]
        %v266 = vld [vmem:[#allocation5 + $0x40] sm:$0xff]
        %v267 = vld [vmem:[#allocation5 + $0x48] sm:$0xff]
        %v268 = vld [vmem:[#allocation5 + $0x50] sm:$0xff]
        %v269 = vld [vmem:[#allocation5 + $0x58] sm:$0xff]
        %v270 = vld [vmem:[#allocation5 + $0x60] sm:$0xff]
        %v271 = vld [vmem:[#allocation5 + $0x68] sm:$0xff]
        %v272 = vld [vmem:[#allocation5 + $0x70] sm:$0xff]
        %v273 = vld [vmem:[#allocation5 + $0x78] sm:$0xff]
        %v274 = vpack.c.bf16 %v259, %v258
        %v275 = vpack.c.bf16 %v261, %v260
        %v276 = vpack.c.bf16 %v263, %v262
        %v277 = vpack.c.bf16 %v265, %v264
        %v278 = vpack.c.bf16 %v267, %v266
        %v279 = vpack.c.bf16 %v269, %v268
        %v280 = vpack.c.bf16 %v271, %v270
        %v281 = vpack.c.bf16 %v273, %v272
        %v282 = vld [vmem:[%s2] sm:$0x1]
        %v284 = vperm.slane %v282, 0
        %286 = vmatpush.bf16.msra.mxu0 %v281
        %287 = vmatpush.bf16.msra.mxu0 %v280
        %288 = vmatpush.bf16.msra.mxu0 %v279
        %289 = vmatpush.bf16.msra.mxu0 %v278
        %290 = vmatpush.bf16.msra.mxu0 %v277
        %291 = vmatpush.bf16.msra.mxu0 %v276
        %292 = vmatpush.bf16.msra.mxu0 %v275
        %293 = vmatpush.bf16.msra.mxu0 %v274
        %294 = vmatmul.bf16.gmra.mxu0 %v242
        %v295 = vpop.f32.mrf.mxu0
        %v296 = vadd.f32 %v284, %v295
        %v297 = vpop.f32.mrf.mxu0
        %v298 = vadd.f32 %v284, %v297
        %299 = vmatmul.bf16.gmra.mxu0 %v243
        %v300 = vpop.f32.mrf.mxu0
        %v301 = vadd.f32 %v284, %v300
        %v302 = vpop.f32.mrf.mxu0
        %v303 = vadd.f32 %v284, %v302
        %304 = vmatmul.bf16.gmra.mxu0 %v244
        %v305 = vpop.f32.mrf.mxu0
        %v306 = vadd.f32 %v284, %v305
        %v307 = vpop.f32.mrf.mxu0
        %v308 = vadd.f32 %v284, %v307
        %309 = vmatmul.bf16.gmra.mxu0 %v245
        %v310 = vpop.f32.mrf.mxu0
        %v311 = vadd.f32 %v284, %v310
        %v312 = vpop.f32.mrf.mxu0
        %v313 = vadd.f32 %v284, %v312
        %314 = vmatmul.bf16.gmra.mxu0 %v246
        %v315 = vpop.f32.mrf.mxu0
        %v316 = vadd.f32 %v284, %v315
        %v317 = vpop.f32.mrf.mxu0
        %v318 = vadd.f32 %v284, %v317
        %319 = vmatmul.bf16.gmra.mxu0 %v247
        %v320 = vpop.f32.mrf.mxu0
        %v321 = vadd.f32 %v284, %v320
        %v322 = vpop.f32.mrf.mxu0
        %v323 = vadd.f32 %v284, %v322
        %324 = vmatmul.bf16.gmra.mxu0 %v248
        %v325 = vpop.f32.mrf.mxu0
        %v326 = vadd.f32 %v284, %v325
        %v327 = vpop.f32.mrf.mxu0
        %v328 = vadd.f32 %v284, %v327
        %329 = vmatmul.bf16.gmra.mxu0 %v249
        %v330 = vpop.f32.mrf.mxu0
        %v331 = vadd.f32 %v284, %v330
        %v332 = vpop.f32.mrf.mxu0
        %v333 = vadd.f32 %v284, %v332
        %334 = vmatmul.bf16.gmra.mxu0 %v250
        %v335 = vpop.f32.mrf.mxu0
        %v336 = vadd.f32 %v284, %v335
        %v337 = vpop.f32.mrf.mxu0
        %v338 = vadd.f32 %v284, %v337
        %339 = vmatmul.bf16.gmra.mxu0 %v251
        %v340 = vpop.f32.mrf.mxu0
        %v341 = vadd.f32 %v284, %v340
        %v342 = vpop.f32.mrf.mxu0
        %v343 = vadd.f32 %v284, %v342
        %344 = vmatmul.bf16.gmra.mxu0 %v252
        %v345 = vpop.f32.mrf.mxu0
        %v346 = vadd.f32 %v284, %v345
        %v347 = vpop.f32.mrf.mxu0
        %v348 = vadd.f32 %v284, %v347
        %349 = vmatmul.bf16.gmra.mxu0 %v253
        %v350 = vpop.f32.mrf.mxu0
        %v351 = vadd.f32 %v284, %v350
        %v352 = vpop.f32.mrf.mxu0
        %v353 = vadd.f32 %v284, %v352
        %354 = vmatmul.bf16.gmra.mxu0 %v254
        %v355 = vpop.f32.mrf.mxu0
        %v356 = vadd.f32 %v284, %v355
        %v357 = vpop.f32.mrf.mxu0
        %v358 = vadd.f32 %v284, %v357
        %359 = vmatmul.bf16.gmra.mxu0 %v255
        %v360 = vpop.f32.mrf.mxu0
        %v361 = vadd.f32 %v284, %v360
        %v362 = vpop.f32.mrf.mxu0
        %v363 = vadd.f32 %v284, %v362
        %364 = vmatmul.bf16.gmra.mxu0 %v256
        %v365 = vpop.f32.mrf.mxu0
        %v366 = vadd.f32 %v284, %v365
        %v367 = vpop.f32.mrf.mxu0
        %v368 = vadd.f32 %v284, %v367
        %369 = vmatmul.bf16.gmra.mxu0 %v257
        %v370 = vpop.f32.mrf.mxu0
        %v371 = vadd.f32 %v284, %v370
        %v372 = vpop.f32.mrf.mxu0
        %v373 = vadd.f32 %v284, %v372
        %374 = vdwg.mxu0
        %v375 = vmax.f32 %v296, 0.0
        %v376 = vmax.f32 %v298, 0.0
        %v377 = vmax.f32 %v301, 0.0
        %v378 = vmax.f32 %v303, 0.0
        %v379 = vmax.f32 %v306, 0.0
        %v380 = vmax.f32 %v308, 0.0
        %v381 = vmax.f32 %v311, 0.0
        %v382 = vmax.f32 %v313, 0.0
        %v383 = vmax.f32 %v316, 0.0
        %v384 = vmax.f32 %v318, 0.0
        %v385 = vmax.f32 %v321, 0.0
        %v386 = vmax.f32 %v323, 0.0
        %v387 = vmax.f32 %v326, 0.0
        %v388 = vmax.f32 %v328, 0.0
        %v389 = vmax.f32 %v331, 0.0
        %v390 = vmax.f32 %v333, 0.0
        %v391 = vmax.f32 %v336, 0.0
        %v392 = vmax.f32 %v338, 0.0
        %v393 = vmax.f32 %v341, 0.0
        %v394 = vmax.f32 %v343, 0.0
        %v395 = vmax.f32 %v346, 0.0
        %v396 = vmax.f32 %v348, 0.0
        %v397 = vmax.f32 %v351, 0.0
        %v398 = vmax.f32 %v353, 0.0
        %v399 = vmax.f32 %v356, 0.0
        %v400 = vmax.f32 %v358, 0.0
        %v401 = vmax.f32 %v361, 0.0
        %v402 = vmax.f32 %v363, 0.0
        %v403 = vmax.f32 %v366, 0.0
        %v404 = vmax.f32 %v368, 0.0
        %v405 = vmax.f32 %v371, 0.0
        %v406 = vmax.f32 %v373, 0.0
        %407 = vst [vmem:[%s207] sm:$0xff] %v375
        %408 = vst [vmem:[%s207 + $0x8] sm:$0xff] %v376
        %409 = vst [vmem:[%s207 + $0x10] sm:$0xff] %v377
        %410 = vst [vmem:[%s207 + $0x18] sm:$0xff] %v378
        %411 = vst [vmem:[%s207 + $0x20] sm:$0xff] %v379
        %412 = vst [vmem:[%s207 + $0x28] sm:$0xff] %v380
        %413 = vst [vmem:[%s207 + $0x30] sm:$0xff] %v381
        %414 = vst [vmem:[%s207 + $0x38] sm:$0xff] %v382
        %415 = vst [vmem:[%s207 + $0x40] sm:$0xff] %v383
        %416 = vst [vmem:[%s207 + $0x48] sm:$0xff] %v384
        %417 = vst [vmem:[%s207 + $0x50] sm:$0xff] %v385
        %418 = vst [vmem:[%s207 + $0x58] sm:$0xff] %v386
        %419 = vst [vmem:[%s207 + $0x60] sm:$0xff] %v387
        %420 = vst [vmem:[%s207 + $0x68] sm:$0xff] %v388
        %421 = vst [vmem:[%s207 + $0x70] sm:$0xff] %v389
        %422 = vst [vmem:[%s207 + $0x78] sm:$0xff] %v390
        %423 = vst [vmem:[%s207 + $0x80] sm:$0xff] %v391
        %424 = vst [vmem:[%s207 + $0x88] sm:$0xff] %v392
        %425 = vst [vmem:[%s207 + $0x90] sm:$0xff] %v393
        %426 = vst [vmem:[%s207 + $0x98] sm:$0xff] %v394
        %427 = vst [vmem:[%s207 + $0xa0] sm:$0xff] %v395
        %428 = vst [vmem:[%s207 + $0xa8] sm:$0xff] %v396
        %429 = vst [vmem:[%s207 + $0xb0] sm:$0xff] %v397
        %430 = vst [vmem:[%s207 + $0xb8] sm:$0xff] %v398
        %431 = vst [vmem:[%s207 + $0xc0] sm:$0xff] %v399
        %432 = vst [vmem:[%s207 + $0xc8] sm:$0xff] %v400
        %433 = vst [vmem:[%s207 + $0xd0] sm:$0xff] %v401
        %434 = vst [vmem:[%s207 + $0xd8] sm:$0xff] %v402
        %435 = vst [vmem:[%s207 + $0xe0] sm:$0xff] %v403
        %436 = vst [vmem:[%s207 + $0xe8] sm:$0xff] %v404
        %437 = vst [vmem:[%s207 + $0xf0] sm:$0xff] %v405
        %438 = vst [vmem:[%s207 + $0xf8] sm:$0xff] %v406
        %s439 = sand.u32 %s97, 1
        %s440 = scalar_lea.sflag [#allocation4], %s439
        %s441 = sand.u32 %s97, 1
        %s442 = smul.addr %s441, 256
        %s443 = scalar_lea.vmem [#allocation7], %s442
        // Predicated region
        $region41: #{tpu_custom_call.1} parent=31 // pred_check
          %p444 = pneg %p107
        $region42: #{tpu_custom_call.1} parent=31 // pred_check_branch
          %446 = sbr.rel (%p444) target = $region44
        $region43: #{tpu_custom_call.1} parent=31 // pred_region
          %s447 = smul.u32 32, %s21
          %449 = vsyncadd %s440, 0
          %s450 = smul.addr %s447, 8
          %s451 = scalar_lea.hbm %s3, %s450
          %s452 = sshll.u32 %s443, 4
          %s453 = int_to_ptr.vmem [resolvable:$true] %s452
          %s454 = sshll.u32 %s451, 4
          %s455 = int_to_ptr.hbm [resolvable:$true] %s454
          %460 = dma.vmem_to_hbm [thread:$0]  %s453, 4096, %s455, %s440, 128, 128, 8
        $region44: #{tpu_custom_call.1} parent=31 // pred_fallthru
          _
      $region32: #{tpu_custom_call.1} parent=5 // pred_fallthru
        _
      %p461 = scmp.le.s32.totalorder 2, %s16
      // Predicated region
      $region45: #{tpu_custom_call.1} parent=5 // pred_check
        %p462 = pneg %p461
      $region46: #{tpu_custom_call.1} parent=5 // pred_check_branch
        %464 = sbr.rel (%p462) target = $region48
      $region47: #{tpu_custom_call.1} parent=5 // pred_region
        %s465 = ssub.s32 %s16, 2
        // Predicated region
        $region49: #{tpu_custom_call.1} parent=47 // pred_check
          %p466 = pneg %p113
        $region50: #{tpu_custom_call.1} parent=47 // pred_check_branch
          %468 = sbr.rel (%p466) target = $region52
        $region51: #{tpu_custom_call.1} parent=47 // pred_region
          %s469 = sand.u32 %s98, 1
          %s470 = scalar_lea.sflag [#allocation4], %s469
          %s471 = sand.u32 %s98, 1
          %s472 = smul.addr %s471, 256
          %s473 = scalar_lea.vmem [#allocation7], %s472
          %475 = dma.done %s470, 4096
        $region52: #{tpu_custom_call.1} parent=47 // pred_fallthru
          _
      $region48: #{tpu_custom_call.1} parent=5 // pred_fallthru
        _
    $region6: #{tpu_custom_call.1} parent=1 // loop_footer
      %s20 = sadd.s32 1, %s16
    $region7: #{tpu_custom_call.1} parent=1 // loop_footer_branch
      %15 = sbr.rel target = $region3
    $region8: #{tpu_custom_call.1} parent=1 // loop_exit
      _
    %476 = vsyncpa [#allocation3], 1
    %s477 = scalar_lea.sflag [#allocation3], 1
    %478 = vsyncpa %s477, 1
    %479 = vsyncpa [#allocation6], 1
    %480 = vsyncpa [#allocation4], 1
    %s481 = scalar_lea.sflag [#allocation4], 1
    %482 = vsyncpa %s481, 1

</llo_original>
